<compile_context>
chip_gen: v6e
topology: v6e:2x2x1
jax: 0.10.0
libtpu: 0.0.40
codegen_flags: <defaults>
</compile_context>

<pallas_src>
import jax
import jax.numpy as jnp
from jax.experimental import pallas as pl
from jax.experimental.pallas import tpu as pltpu


def _round_up(v, m):
    return (v + m - 1) // m * m


def _linear_kernel(x_ref, w_ref, b_ref, o_ref, acc_ref):
    # Grid = (M tiles, N tiles, K tiles); K is the innermost reduction axis.
    k = pl.program_id(2)

    @pl.when(k == 0)
    def _():
        acc_ref[...] = jnp.zeros_like(acc_ref)

    # bf16 operands -> MXU, f32 accumulation.
    acc_ref[...] += jnp.dot(
        x_ref[...], w_ref[...], preferred_element_type=jnp.float32
    )

    # Bias add + cast only once, in the last-K epilogue (lane-dense 128-wide store).
    @pl.when(k == pl.num_programs(2) - 1)
    def _():
        o_ref[...] = (acc_ref[...] + b_ref[...]).astype(o_ref.dtype)


def _pallas_linear(x, w, b, *, tm=128, tn=128, tk=128):
    """y = x @ w + b via a tiled Pallas TPU matmul.

    x: [M, K] (any float dtype), w: [K, N], b: [N].  Inputs are cast to bf16
    for the MXU; accumulation and bias add are f32; output is returned in
    x.dtype with the original (unpadded) shape.
    """
    M, K = x.shape
    K2, N = w.shape
    assert K == K2 and b.shape == (N,)

    # M tile: at least sublane-aligned (8), at most 128.  N/K tiles: 128-aligned
    # so the output store is lane-dense (no masked vst) and MXU operands are full.
    tm = min(tm, _round_up(M, 8))
    Mp = _round_up(M, tm)
    Kp = _round_up(K, tk)
    Np = _round_up(N, tn)

    x_p = jnp.pad(x, ((0, Mp - M), (0, Kp - K))).astype(jnp.bfloat16)
    w_p = jnp.pad(w, ((0, Kp - K), (0, Np - N))).astype(jnp.bfloat16)
    b_p = jnp.pad(b.astype(jnp.float32), (0, Np - N)).reshape(1, Np)

    grid = (Mp // tm, Np // tn, Kp // tk)

    cost = pl.CostEstimate(
        flops=2 * Mp * Np * Kp,
        bytes_accessed=(x_p.size * 2 + w_p.size * 2 + b_p.size * 4 + Mp * Np * 4),
        transcendentals=0,
    )

    out_padded = pl.pallas_call(
        _linear_kernel,
        out_shape=jax.ShapeDtypeStruct((Mp, Np), jnp.float32),
        grid_spec=pltpu.PrefetchScalarGridSpec(
            num_scalar_prefetch=0,
            grid=grid,
            in_specs=[
                pl.BlockSpec((tm, tk), lambda i, j, k: (i, k)),  # x tile
                pl.BlockSpec((tk, tn), lambda i, j, k: (k, j)),  # w tile
                pl.BlockSpec((1, tn), lambda i, j, k: (0, j)),   # bias tile
            ],
            out_specs=pl.BlockSpec((tm, tn), lambda i, j, k: (i, j)),
            scratch_shapes=[pltpu.VMEM((tm, tn), jnp.float32)],
        ),
        compiler_params=pltpu.CompilerParams(
            # M/N tiles are independent -> megacore-parallel on v7x; K is the
            # reduction (accumulator carried across it) -> arbitrary.
            dimension_semantics=("parallel", "parallel", "arbitrary"),
            # Small, explicit budget: fits v7x's 64 MiB physical VMEM with headroom.
            vmem_limit_bytes=32 * 1024 * 1024,
        ),
        cost_estimate=cost,
    )(x_p, w_p, b_p)

    return out_padded[:M, :N].astype(x.dtype)


class WrappedLinear:
    """Stand-in for the module the Freezer wraps (a Linear layer)."""

    def __init__(self, hidden, out, key):
        kw, kb = jax.random.split(key)
        # PyTorch-style uniform init with bound 1/sqrt(fan_in); params kept in f32,
        # cast to bf16 at the kernel boundary (frozen weights, so this is loss-free
        # w.r.t. training dynamics).
        bound = 1.0 / (hidden ** 0.5)
        self.weight = jax.random.uniform(
            kw, (hidden, out), jnp.float32, -bound, bound
        )
        self.bias = jax.random.uniform(kb, (out,), jnp.float32, -bound, bound)
        self.training = True

    def __call__(self, x):
        return _pallas_linear(x, self.weight, self.bias)


class Freezer:
    """JAX/Pallas equivalent of the PyTorch Freezer wrapper."""

    def __init__(self, wrapped):
        self.wrapped = wrapped
        # self.wrapped.eval()
        self.wrapped.training = False

    def train(self, mode):
        # no-op: the wrapped module stays frozen in eval mode
        pass

    def __call__(self, *inputs):
        # torch.no_grad() equivalent: block gradient flow through the result.
        # TODO(synk): stop_gradient reproduces no_grad semantics but (as in the
        # PyTorch original) does not skip any forward compute.
        r = self.wrapped(*inputs)
        return jax.lax.stop_gradient(r)


if __name__ == "__main__":
    key = jax.random.PRNGKey(0)
    k_x, k_w, k_x2, k_w2 = jax.random.split(key, 4)

    # --- Test 1: original toy shape (single-tile grid after padding) ---
    batch, hidden, out = 8, 32, 64
    x = jax.random.normal(k_x, (batch, hidden), jnp.float32)
    frozen = Freezer(WrappedLinear(hidden, out, k_w))
    frozen.train(True)  # no-op, as in the PyTorch module

    y = frozen(x)
    jax.block_until_ready(y)
    y_ref = x @ frozen.wrapped.weight + frozen.wrapped.bias
    assert y.shape == (batch, out)
    # bf16 MXU inputs -> looser tolerance than pure-f32.
    assert jnp.allclose(y, y_ref, atol=3e-2, rtol=3e-2)

    # --- Test 2: multi-tile grid (exercises M/N tiling, K reduction, padding) ---
    batch2, hidden2, out2 = 192, 320, 384
    x2 = jax.random.normal(k_x2, (batch2, hidden2), jnp.float32)
    frozen2 = Freezer(WrappedLinear(hidden2, out2, k_w2))
    y2 = frozen2(x2)
    jax.block_until_ready(y2)
    y2_ref = x2 @ frozen2.wrapped.weight + frozen2.wrapped.bias
    assert y2.shape == (batch2, out2)
    assert jnp.allclose(y2, y2_ref, atol=5e-2, rtol=5e-2)

    print("KERNEL_OK")
</pallas_src>

<mosaic_0001>
module attributes {stable_mosaic.version = 11 : i64} {
  func.func @_linear_kernel(%arg0: i32, %arg1: i32, %arg2: i32, %arg3: memref<8x128xbf16, #tpu.memory_space<vmem>>, %arg4: memref<128x128xbf16, #tpu.memory_space<vmem>>, %arg5: memref<1x128xf32, #tpu.memory_space<vmem>>, %arg6: memref<8x128xf32, #tpu.memory_space<vmem>>, %arg7: memref<8x128xf32, #tpu.memory_space<vmem>>) attributes {dimension_semantics = [#tpu.dimension_semantics<parallel>, #tpu.dimension_semantics<parallel>, #tpu.dimension_semantics<arbitrary>], iteration_bounds = array<i64: 1, 1, 1>, scalar_prefetch = 0 : i64, scratch_operands = 1 : i64, tpu.core_type = #tpu.core_type<tc>, window_params = [{transform_indices = @transform_0, window_bounds = array<i64: 8, 128>}, {transform_indices = @transform_1, window_bounds = array<i64: 128, 128>}, {transform_indices = @transform_2, window_bounds = array<i64: 1, 128>}, {transform_indices = @transform_3, window_bounds = array<i64: 8, 128>}]} {
    %c0_i32 = arith.constant 0 : i32
    %0 = arith.cmpi eq, %arg2, %c0_i32 : i32
    %1 = arith.extui %0 : i1 to i32
    %c0_i32_0 = arith.constant 0 : i32
    %2 = arith.cmpi ne, %1, %c0_i32_0 : i32
    scf.if %2 {
      %cst_10 = arith.constant 0.000000e+00 : f32
      %12 = vector.broadcast %cst_10 : f32 to vector<8x128xf32>
      %c0_11 = arith.constant 0 : index
      %c0_12 = arith.constant 0 : index
      %13 = vector.load %arg7[%c0_11, %c0_12] : memref<8x128xf32, #tpu.memory_space<vmem>>, vector<8x128xf32>
      tpu.vector_store %arg7[%c0_11, %c0_12], %12 {strides = array<i32>} : memref<8x128xf32, #tpu.memory_space<vmem>>, vector<8x128xf32>,
    } else {
    }
    %c0 = arith.constant 0 : index
    %c0_1 = arith.constant 0 : index
    %3 = vector.load %arg7[%c0, %c0_1] : memref<8x128xf32, #tpu.memory_space<vmem>>, vector<8x128xf32>
    %c0_2 = arith.constant 0 : index
    %c0_3 = arith.constant 0 : index
    %4 = vector.load %arg3[%c0_2, %c0_3] : memref<8x128xbf16, #tpu.memory_space<vmem>>, vector<8x128xbf16>
    %c0_4 = arith.constant 0 : index
    %c0_5 = arith.constant 0 : index
    %5 = vector.load %arg4[%c0_4, %c0_5] : memref<128x128xbf16, #tpu.memory_space<vmem>>, vector<128x128xbf16>
    %cst = arith.constant dense<0.000000e+00> : vector<8x128xf32>
    %6 = tpu.matmul %4, %5, %cst {dimension_numbers = #tpu.dot_dimension_numbers<[1], [0], [0], [1], [0, 0, 1, 1], [], []>} : vector<8x128xbf16>, vector<128x128xbf16>, vector<8x128xf32> -> vector<8x128xf32>
    %7 = arith.addf %3, %6 : vector<8x128xf32>
    %c0_6 = arith.constant 0 : index
    %c0_7 = arith.constant 0 : index
    %8 = vector.load %arg7[%c0_6, %c0_7] : memref<8x128xf32, #tpu.memory_space<vmem>>, vector<8x128xf32>
    tpu.vector_store %arg7[%c0_6, %c0_7], %7 {strides = array<i32>} : memref<8x128xf32, #tpu.memory_space<vmem>>, vector<8x128xf32>,
    %c0_i32_8 = arith.constant 0 : i32
    %9 = arith.cmpi eq, %arg2, %c0_i32_8 : i32
    %10 = arith.extui %9 : i1 to i32
    %c0_i32_9 = arith.constant 0 : i32
    %11 = arith.cmpi ne, %10, %c0_i32_9 : i32
    scf.if %11 {
      %c0_10 = arith.constant 0 : index
      %c0_11 = arith.constant 0 : index
      %12 = vector.load %arg7[%c0_10, %c0_11] : memref<8x128xf32, #tpu.memory_space<vmem>>, vector<8x128xf32>
      %c0_12 = arith.constant 0 : index
      %c0_13 = arith.constant 0 : index
      %13 = vector.load %arg5[%c0_12, %c0_13] : memref<1x128xf32, #tpu.memory_space<vmem>>, vector<1x128xf32>
      %14 = vector.broadcast %13 : vector<1x128xf32> to vector<8x128xf32>
      %15 = arith.addf %12, %14 : vector<8x128xf32>
      %c0_14 = arith.constant 0 : index
      %c0_15 = arith.constant 0 : index
      %16 = vector.load %arg6[%c0_14, %c0_15] : memref<8x128xf32, #tpu.memory_space<vmem>>, vector<8x128xf32>
      tpu.vector_store %arg6[%c0_14, %c0_15], %15 {strides = array<i32>} : memref<8x128xf32, #tpu.memory_space<vmem>>, vector<8x128xf32>,
    } else {
    }
    return
  }
  func.func @transform_0(%arg0: i32, %arg1: i32, %arg2: i32) -> (i32, i32) {
    %c0_i32 = arith.constant 0 : i32
    return %arg0, %arg2 : i32, i32
  }
  func.func @transform_1(%arg0: i32, %arg1: i32, %arg2: i32) -> (i32, i32) {
    %c0_i32 = arith.constant 0 : i32
    return %arg2, %arg1 : i32, i32
  }
  func.func @transform_2(%arg0: i32, %arg1: i32, %arg2: i32) -> (i32, i32) {
    %c0_i32 = arith.constant 0 : i32
    %c0_i32_0 = arith.constant 0 : i32
    return %c0_i32, %arg1 : i32, i32
  }
  func.func @transform_3(%arg0: i32, %arg1: i32, %arg2: i32) -> (i32, i32) {
    %c0_i32 = arith.constant 0 : i32
    return %arg0, %arg1 : i32, i32
  }
}

</mosaic_0001>

<llo_original>
// kernel: tpu_custom_call.1
$region0: #{tpu_custom_call.1}
  #allocation0 [shape = 'u32[]', space=smem, size = 0x4, offset = 0x4, fixed_abs, tag = 'smem constant byte address 0x4 - core index']
  #allocation1 [shape = 'u32[144,128]{1,0:T(1,128)}', space=vmem, size = 0x12000, scoped, tag = 'internal scratch']
  #allocation2 [shape = 'f32[8,128]{1,0:T(8,128)}', space=vmem, size = 0x1000, scoped, tag = 'scratch operand']
  %s0 = inlined_call_operand.hbm [shape: bf16[8,128], index: 0, kind: input, shape index: {}]
  %s1 = inlined_call_operand.hbm [shape: bf16[128,128], index: 1, kind: input, shape index: {}]
  %s2 = inlined_call_operand.vmem [shape: f32[1,128], index: 2, kind: input, shape index: {}]
  %s3 = inlined_call_operand.hbm [shape: f32[8,128], index: 3, kind: output, shape index: {}]
  %s4 = sld [smem:[#allocation0]]
  $region38: #{tpu_custom_call.1} parent=0
    _
  %s6 = ssub.s32 1, %s4
  %s7 = scalar_select 0, %s6, %s4
  $region1: #{tpu_custom_call.1} parent=0
    #allocation3 [shape = 'u8[2048]{0}', space=vmem, size = 0x800, scoped, tag = 'input window, operand 0, single buffered']
    #allocation4 [shape = 's32[1]{0}', space=sflag, size = 0x4, scoped, tag = 'scoped memory for tpu_custom_call.1']
    #allocation5 [shape = 's32[1]{0}', space=sflag, size = 0x4, scoped, tag = 'scoped memory for tpu_custom_call.1']
    #allocation6 [shape = 'u8[32768]{0}', space=vmem, size = 0x8000, scoped, tag = 'input window, operand 1, single buffered']
    #allocation7 [shape = 's32[1]{0}', space=sflag, size = 0x4, scoped, tag = 'scoped memory for tpu_custom_call.1']
    #allocation8 [shape = 'u8[4096]{0}', space=vmem, size = 0x1000, scoped, tag = 'output window, operand 0, single buffered']
    %8 = vsyncpa [#allocation4], 0
    %9 = vsyncpa [#allocation7], 0
    %10 = vsyncpa [#allocation5], 0
    // Predicated region
    $region2: #{tpu_custom_call.1} parent=1 // pred_check
      _
    $region3: #{tpu_custom_call.1} parent=1 // pred_check_branch
      %12 = sbr.rel (0) target = $region5
    $region4: #{tpu_custom_call.1} parent=1 // pred_region
      %s14 = ssub.s32 64, 64
      %15 = vsyncadd [#allocation4], %s14
      %s17 = sshll.u32 [#allocation3], 4
      %s18 = int_to_ptr.vmem [resolvable:$true] %s17
      %20 = dma.hbm_to_vmem [thread:$0]  %s0, 64, %s18, [#allocation4]
    $region5: #{tpu_custom_call.1} parent=1 // pred_fallthru
      _
    // Predicated region
    $region6: #{tpu_custom_call.1} parent=1 // pred_check
      _
    $region7: #{tpu_custom_call.1} parent=1 // pred_check_branch
      %22 = sbr.rel (0) target = $region9
    $region8: #{tpu_custom_call.1} parent=1 // pred_region
      %s24 = ssub.s32 1024, 1024
      %25 = vsyncadd [#allocation7], %s24
      %s26 = sshll.u32 [#allocation6], 4
      %s27 = int_to_ptr.vmem [resolvable:$true] %s26
      %32 = dma.hbm_to_vmem [thread:$0]  %s1, 1024, %s27, [#allocation7], 64, 64, 4
    $region9: #{tpu_custom_call.1} parent=1 // pred_fallthru
      _
    // Predicated region
    $region10: #{tpu_custom_call.1} parent=1 // pred_check
      _
    $region11: #{tpu_custom_call.1} parent=1 // pred_check_branch
      %34 = sbr.rel (0) target = $region13
    $region12: #{tpu_custom_call.1} parent=1 // pred_region
      _
    $region13: #{tpu_custom_call.1} parent=1 // pred_fallthru
      _
    // Predicated region
    $region14: #{tpu_custom_call.1} parent=1 // pred_check
      _
    $region15: #{tpu_custom_call.1} parent=1 // pred_check_branch
      %36 = sbr.rel (0) target = $region17
    $region16: #{tpu_custom_call.1} parent=1 // pred_region
      %37 = dma.done [#allocation4], 64
    $region17: #{tpu_custom_call.1} parent=1 // pred_fallthru
      _
    // Predicated region
    $region18: #{tpu_custom_call.1} parent=1 // pred_check
      _
    $region19: #{tpu_custom_call.1} parent=1 // pred_check_branch
      %39 = sbr.rel (0) target = $region21
    $region20: #{tpu_custom_call.1} parent=1 // pred_region
      %40 = dma.done [#allocation7], 1024
    $region21: #{tpu_custom_call.1} parent=1 // pred_fallthru
      _
    %p42 = scmp.eq.s32.totalorder 0, 0
    // Predicated region
    $region22: #{tpu_custom_call.1} parent=1 // pred_check
      %p43 = pneg %p42
    $region23: #{tpu_custom_call.1} parent=1 // pred_check_branch
      %45 = sbr.rel (%p43) target = $region25
    $region24: #{tpu_custom_call.1} parent=1 // pred_region
      %46 = vst [vmem:[#allocation2] sm:$0xff] 0.0
    $region25: #{tpu_custom_call.1} parent=1 // pred_fallthru
      _
    %v47 = vld [vmem:[#allocation2] sm:$0xff]
    %v48 = vld [vmem:[#allocation3] sm:$0xf]
    %v49 = vld [vmem:[#allocation6] sm:$0xf]
    %v50 = vld [vmem:[#allocation6 + $0x4] sm:$0xf]
    %v51 = vld [vmem:[#allocation6 + $0x8] sm:$0xf]
    %v52 = vld [vmem:[#allocation6 + $0xc] sm:$0xf]
    %v53 = vld [vmem:[#allocation6 + $0x10] sm:$0xf]
    %v54 = vld [vmem:[#allocation6 + $0x14] sm:$0xf]
    %v55 = vld [vmem:[#allocation6 + $0x18] sm:$0xf]
    %v56 = vld [vmem:[#allocation6 + $0x1c] sm:$0xf]
    %v57 = vld [vmem:[#allocation6 + $0x20] sm:$0xf]
    %v58 = vld [vmem:[#allocation6 + $0x24] sm:$0xf]
    %v59 = vld [vmem:[#allocation6 + $0x28] sm:$0xf]
    %v60 = vld [vmem:[#allocation6 + $0x2c] sm:$0xf]
    %v61 = vld [vmem:[#allocation6 + $0x30] sm:$0xf]
    %v62 = vld [vmem:[#allocation6 + $0x34] sm:$0xf]
    %v63 = vld [vmem:[#allocation6 + $0x38] sm:$0xf]
    %v64 = vld [vmem:[#allocation6 + $0x3c] sm:$0xf]
    %v81 = vunpack.c.l.b16 %v49
    %v82 = vunpack.c.l.b16 %v50
    %v83 = vunpack.c.l.b16 %v51
    %v84 = vunpack.c.l.b16 %v52
    %v85 = vunpack.c.l.b16 %v53
    %v86 = vunpack.c.l.b16 %v54
    %v87 = vunpack.c.l.b16 %v55
    %v88 = vunpack.c.l.b16 %v56
    %v89 = vunpack.c.l.b16 %v57
    %v90 = vunpack.c.l.b16 %v58
    %v91 = vunpack.c.l.b16 %v59
    %v92 = vunpack.c.l.b16 %v60
    %v93 = vunpack.c.l.b16 %v61
    %v94 = vunpack.c.l.b16 %v62
    %v95 = vunpack.c.l.b16 %v63
    %v96 = vunpack.c.l.b16 %v64
    %v97 = vpack.c.b16 %v82, %v81
    %v98 = vpack.c.b16 %v84, %v83
    %v99 = vpack.c.b16 %v86, %v85
    %v100 = vpack.c.b16 %v88, %v87
    %v101 = vpack.c.b16 %v90, %v89
    %v102 = vpack.c.b16 %v92, %v91
    %v103 = vpack.c.b16 %v94, %v93
    %v104 = vpack.c.b16 %v96, %v95
    %113 = vmatprep.subr.bf16.mxu0 0
    %114 = vmatpush1.bf16.msra.mxu0 %v104
    %115 = vmatprep.subr.bf16.mxu0 0
    %116 = vmatpush1.bf16.msra.mxu0 %v103
    %117 = vmatprep.subr.bf16.mxu0 0
    %118 = vmatpush1.bf16.msra.mxu0 %v102
    %119 = vmatprep.subr.bf16.mxu0 0
    %120 = vmatpush1.bf16.msra.mxu0 %v101
    %121 = vmatprep.subr.bf16.mxu0 0
    %122 = vmatpush1.bf16.msra.mxu0 %v100
    %123 = vmatprep.subr.bf16.mxu0 0
    %124 = vmatpush1.bf16.msra.mxu0 %v99
    %125 = vmatprep.subr.bf16.mxu0 0
    %126 = vmatpush1.bf16.msra.mxu0 %v98
    %127 = vmatprep.subr.bf16.mxu0 0
    %128 = vmatpush1.bf16.msra.mxu0 %v97
    %129 = vmatprep.subr.bf16.mxu0 0
    %130 = vmatpush2.bf16.msra.mxu0 0
    %131 = vmatprep.subr.bf16.mxu0 0
    %132 = vmatpush2.bf16.msra.mxu0 0
    %133 = vmatprep.subr.bf16.mxu0 0
    %134 = vmatpush2.bf16.msra.mxu0 0
    %135 = vmatprep.subr.bf16.mxu0 0
    %136 = vmatpush2.bf16.msra.mxu0 0
    %137 = vmatprep.subr.bf16.mxu0 0
    %138 = vmatpush2.bf16.msra.mxu0 0
    %139 = vmatprep.subr.bf16.mxu0 0
    %140 = vmatpush2.bf16.msra.mxu0 0
    %141 = vmatprep.subr.bf16.mxu0 0
    %142 = vmatpush2.bf16.msra.mxu0 0
    %143 = vmatprep.subr.bf16.mxu0 0
    %144 = vmatpush2.bf16.msra.mxu0 0
    %145 = vmatprep.mubr.bf16.mxu0 0
    %146 = vmatmul.mubr.bf16.gmra.mxu0 %v48
    %v147 = vpop.f32.mrf.mxu0
    %v148 = vadd.f32 0.0, %v147
    %v149 = vpop.f32.mrf.mxu0
    %v150 = vpop.f32.mrf.mxu0
    %v151 = vpop.f32.mrf.mxu0
    %152 = vdwg.mxu0
    %v153 = vadd.f32 %v47, %v148
    %154 = vst [vmem:[#allocation2] sm:$0xff] %v153
    // Predicated region
    $region26: #{tpu_custom_call.1} parent=1 // pred_check
      %p155 = pneg %p42
    $region27: #{tpu_custom_call.1} parent=1 // pred_check_branch
      %157 = sbr.rel (%p155) target = $region29
    $region28: #{tpu_custom_call.1} parent=1 // pred_region
      %v158 = vld [vmem:[#allocation2] sm:$0xff]
      %v159 = vld [vmem:[%s2] sm:$0x1]
      %v161 = vlaneseq
      %v162 = vshrl.u32 %v161, 7
      %v163 = vsub.s32 0, %v162
      %v164 = vrot.slane %v159, %v163
      %v166 = vadd.f32 %v158, %v164
      %167 = vst [vmem:[#allocation8] sm:$0xff] %v166
    $region29: #{tpu_custom_call.1} parent=1 // pred_fallthru
      _
    // Predicated region
    $region30: #{tpu_custom_call.1} parent=1 // pred_check
      _
    $region31: #{tpu_custom_call.1} parent=1 // pred_check_branch
      %169 = sbr.rel (0) target = $region33
    $region32: #{tpu_custom_call.1} parent=1 // pred_region
      %s171 = ssub.s32 128, 128
      %172 = vsyncadd [#allocation5], %s171
      %s174 = sshll.u32 [#allocation8], 4
      %s175 = int_to_ptr.vmem [resolvable:$true] %s174
      %177 = dma.vmem_to_hbm [thread:$0]  %s175, 128, %s3, [#allocation5]
    $region33: #{tpu_custom_call.1} parent=1 // pred_fallthru
      _
    // Predicated region
    $region34: #{tpu_custom_call.1} parent=1 // pred_check
      _
    $region35: #{tpu_custom_call.1} parent=1 // pred_check_branch
      %179 = sbr.rel (0) target = $region37
    $region36: #{tpu_custom_call.1} parent=1 // pred_region
      %180 = dma.done [#allocation5], 128
    $region37: #{tpu_custom_call.1} parent=1 // pred_fallthru
      _
    %181 = vsyncpa [#allocation4], 1
    %182 = vsyncpa [#allocation7], 1
    %183 = vsyncpa [#allocation5], 1

</llo_original>
